<compile_context>
chip_gen: v7x
topology: tpu7x:2x2x1
jax: 0.10.0
libtpu: 0.0.40
codegen_flags: <defaults>
</compile_context>

<pallas_src>
import functools

import jax
import jax.numpy as jnp
from jax.experimental import pallas as pl
from jax.experimental.pallas import tpu as pltpu


_VMEM_LIMIT_BYTES = 40 * 1024 * 1024           # safe on v5e/v6e (128 MiB) and v7x (64 MiB)
_SINGLE_BLOCK_BUDGET_BYTES = 24 * 1024 * 1024  # keep single-block path well under v7x scoped VMEM


def _kl_term(s, t, d, axis):
    """Per-slice KL( softmax(t) || softmax(s) ) along `axis`, fused form (keepdims).

    KL_slice = sum_axis(e_t * (dt - ds)) / Z_t + log Z_s - log Z_t
    where ds = s - max(s), dt = t - max(t), dt - ds = d - (m_t - m_s), d = t - s.
    """
    m_s = jnp.max(s, axis=axis, keepdims=True)
    m_t = jnp.max(t, axis=axis, keepdims=True)
    z_s = jnp.sum(jnp.exp(s - m_s), axis=axis, keepdims=True)
    e_t = jnp.exp(t - m_t)
    z_t = jnp.sum(e_t, axis=axis, keepdims=True)
    cross = jnp.sum(e_t * (d - (m_t - m_s)), axis=axis, keepdims=True) / z_t
    return cross + jnp.log(z_s) - jnp.log(z_t)


# ----------------------------------------------------------------------------
# Single-block kernel: both terms in one grid-less invocation (small matrices).
# ----------------------------------------------------------------------------
def _dml_single_block_kernel(s_ref, t_ref, o_ref, *, smooth):
    s = s_ref[...].astype(jnp.float32) * smooth   # "input"  logits
    t = t_ref[...].astype(jnp.float32) * smooth   # "target" logits
    d = t - s                                      # shared by both terms

    n_rows, n_cols = s.shape
    v2t = jnp.sum(_kl_term(s, t, d, axis=1)) / jnp.float32(n_rows)   # row softmax
    t2v = jnp.sum(_kl_term(s, t, d, axis=0)) / jnp.float32(n_cols)   # col softmax (== transposed)
    o_ref[0, 0] = v2t + t2v


def _dml_single_block(scores, scores_t, smooth):
    kernel = functools.partial(_dml_single_block_kernel, smooth=float(smooth))
    out = pl.pallas_call(
        kernel,
        out_shape=jax.ShapeDtypeStruct((1, 1), jnp.float32),
        in_specs=[
            pl.BlockSpec(memory_space=pltpu.MemorySpace.VMEM),
            pl.BlockSpec(memory_space=pltpu.MemorySpace.VMEM),
        ],
        out_specs=pl.BlockSpec(memory_space=pltpu.MemorySpace.SMEM),
        compiler_params=pltpu.CompilerParams(vmem_limit_bytes=_VMEM_LIMIT_BYTES),
    )(scores, scores_t)
    return out[0, 0]


# ----------------------------------------------------------------------------
# Tiled kernel: one KL term, softmax axis fully inside the block, the other axis
# tiled over the grid. Scalar SMEM accumulator resident across the grid.
# ----------------------------------------------------------------------------
def _dml_kl_tiled_kernel(s_ref, t_ref, o_ref, *, smooth, softmax_axis,
                         tiled_axis, logical_size):
    i = pl.program_id(0)

    @pl.when(i == 0)
    def _():
        o_ref[0, 0] = jnp.float32(0.0)

    s = s_ref[...].astype(jnp.float32) * smooth
    t = t_ref[...].astype(jnp.float32) * smooth
    per_slice = _kl_term(s, t, t - s, axis=softmax_axis)

    # Mask slices of the tiled axis beyond the logical array extent (the padded
    # part of a partial last block holds garbage; select it away before reducing).
    tile = per_slice.shape[tiled_axis]
    idx = i * tile + jax.lax.broadcasted_iota(jnp.int32, per_slice.shape, tiled_axis)
    per_slice = jnp.where(idx < logical_size, per_slice, jnp.float32(0.0))

    o_ref[0, 0] += jnp.sum(per_slice)


def _kl_tiled(scores, scores_t, smooth, softmax_axis, tile):
    """One batch-mean KL term. softmax_axis=1 -> row softmax (v2t); 0 -> column (t2v)."""
    N, M = scores.shape
    if softmax_axis in (1, -1):
        tiled_axis, logical, denom = 0, N, N
        num_tiles = pl.cdiv(N, tile)
        block = (tile, M)
    else:
        tiled_axis, logical, denom = 1, M, M
        num_tiles = pl.cdiv(M, tile)
        block = (N, tile)

    def imap(i):
        return (i, 0) if tiled_axis == 0 else (0, i)

    kernel = functools.partial(
        _dml_kl_tiled_kernel, smooth=float(smooth), softmax_axis=softmax_axis,
        tiled_axis=tiled_axis, logical_size=logical)

    out = pl.pallas_call(
        kernel,
        out_shape=jax.ShapeDtypeStruct((1, 1), jnp.float32),
        grid=(num_tiles,),
        in_specs=[pl.BlockSpec(block, imap), pl.BlockSpec(block, imap)],
        out_specs=pl.BlockSpec((1, 1), lambda i: (0, 0),
                               memory_space=pltpu.MemorySpace.SMEM),
        compiler_params=pltpu.CompilerParams(
            dimension_semantics=("arbitrary",),      # output revisited -> accumulator
            vmem_limit_bytes=_VMEM_LIMIT_BYTES),
    )(scores, scores_t)
    return out[0, 0] / jnp.float32(denom)


def _pick_tile(dim, target, quantum):
    if dim <= target:
        return dim                                   # full extent is always a legal block dim
    return max(quantum, (target // quantum) * quantum)


def dml_loss(scores, scores_t, smooth=10.0):
    """Pallas implementation of DMLLoss.forward(scores, scores_t)."""
    assert scores.shape == scores_t.shape and scores.ndim == 2
    N, M = scores.shape
    # ~12x N*M*4 bytes live in the fused single-block kernel (incl. double-buffered inputs).
    if N * M * 4 * 12 <= _SINGLE_BLOCK_BUDGET_BYTES:
        return _dml_single_block(scores, scores_t, smooth)
    # Large matrices: pipelined row-tiled call (dim=-1 term) + column-tiled call (dim=0 term).
    # TODO(synk): if BOTH N and M are huge, blocks (tile, M)/(N, tile) still exceed VMEM;
    # that would need 2-D tiling with online (flash-style) softmax accumulators.
    v2t = _kl_tiled(scores, scores_t, smooth, softmax_axis=1, tile=_pick_tile(N, 512, 8))
    t2v = _kl_tiled(scores, scores_t, smooth, softmax_axis=0, tile=_pick_tile(M, 512, 128))
    return v2t + t2v


# ----------------------------------------------------------------------------
# Pure-JAX reference mirroring the PyTorch semantics.
# ----------------------------------------------------------------------------
def _reference(scores, scores_t, smooth=10.0):
    def kl_batchmean(a, b):
        logp = jax.nn.log_softmax(a, axis=-1)
        logq = jax.nn.log_softmax(b, axis=-1)
        q = jnp.exp(logq)
        return jnp.sum(q * (logq - logp)) / a.shape[0]

    v2t = kl_batchmean(smooth * scores, smooth * scores_t)
    t2v = kl_batchmean(smooth * scores.T, smooth * scores_t.T)
    return v2t + t2v


if __name__ == "__main__":
    key = jax.random.PRNGKey(0)
    k1, k2, k3, k4 = jax.random.split(key, 4)

    # Production-like small shape (8 video vs 16 text embeddings) -> single-block path.
    N, M = 8, 16
    scores = jax.random.normal(k1, (N, M), dtype=jnp.float32)
    scores_t = jax.random.normal(k2, (N, M), dtype=jnp.float32)
    loss = dml_loss(scores, scores_t, smooth=10.0)
    jax.block_until_ready(loss)
    ref = _reference(scores, scores_t, smooth=10.0)
    assert jnp.allclose(loss, ref, rtol=1e-4, atol=1e-5), (loss, ref)

    # Larger shape exercising the tiled / pipelined path, including partial tiles
    # on both the row-tiled (200 % 128 != 0) and column-tiled (320 % 128 != 0) terms.
    N2, M2 = 200, 320
    s2 = jax.random.normal(k3, (N2, M2), dtype=jnp.float32)
    t2 = jax.random.normal(k4, (N2, M2), dtype=jnp.float32)
    loss2 = (_kl_tiled(s2, t2, 10.0, softmax_axis=1, tile=128)
             + _kl_tiled(s2, t2, 10.0, softmax_axis=0, tile=128))
    jax.block_until_ready(loss2)
    ref2 = _reference(s2, t2, smooth=10.0)
    assert jnp.allclose(loss2, ref2, rtol=1e-3, atol=1e-3), (loss2, ref2)

    print("KERNEL_OK")
</pallas_src>

<mosaic_0001>
module attributes {stable_mosaic.version = 11 : i64} {
  func.func @_dml_single_block_kernel(%arg0: memref<8x16xf32, #tpu.memory_space<vmem>>, %arg1: memref<8x16xf32, #tpu.memory_space<vmem>>, %arg2: memref<1x1xf32, #tpu.memory_space<smem>>) attributes {dimension_semantics = [], scalar_prefetch = 0 : i64, scratch_operands = 0 : i64, tpu.core_type = #tpu.core_type<tc>} {
    %c0 = arith.constant 0 : index
    %c0_0 = arith.constant 0 : index
    %0 = vector.load %arg0[%c0, %c0_0] : memref<8x16xf32, #tpu.memory_space<vmem>>, vector<8x16xf32>
    %cst = arith.constant 1.000000e+01 : f32
    %1 = vector.broadcast %cst : f32 to vector<8x16xf32>
    %2 = arith.mulf %0, %1 : vector<8x16xf32>
    %c0_1 = arith.constant 0 : index
    %c0_2 = arith.constant 0 : index
    %3 = vector.load %arg1[%c0_1, %c0_2] : memref<8x16xf32, #tpu.memory_space<vmem>>, vector<8x16xf32>
    %cst_3 = arith.constant 1.000000e+01 : f32
    %4 = vector.broadcast %cst_3 : f32 to vector<8x16xf32>
    %5 = arith.mulf %3, %4 : vector<8x16xf32>
    %6 = arith.subf %5, %2 : vector<8x16xf32>
    %cst_4 = arith.constant dense<0xFF800000> : vector<8xf32>
    %7 = vector.multi_reduction <maximumf>, %2, %cst_4 [1] : vector<8x16xf32> to vector<8xf32>
    %8 = vector.shape_cast %7 : vector<8xf32> to vector<8x1xf32>
    %cst_5 = arith.constant dense<0xFF800000> : vector<8xf32>
    %9 = vector.multi_reduction <maximumf>, %5, %cst_5 [1] : vector<8x16xf32> to vector<8xf32>
    %10 = vector.shape_cast %9 : vector<8xf32> to vector<8x1xf32>
    %11 = vector.broadcast %8 : vector<8x1xf32> to vector<8x16xf32>
    %12 = arith.subf %2, %11 : vector<8x16xf32>
    %13 = math.exp %12 : vector<8x16xf32>
    %cst_6 = arith.constant dense<0.000000e+00> : vector<8xf32>
    %14 = vector.multi_reduction <add>, %13, %cst_6 [1] : vector<8x16xf32> to vector<8xf32>
    %15 = vector.shape_cast %14 : vector<8xf32> to vector<8x1xf32>
    %16 = vector.broadcast %10 : vector<8x1xf32> to vector<8x16xf32>
    %17 = arith.subf %5, %16 : vector<8x16xf32>
    %18 = math.exp %17 : vector<8x16xf32>
    %cst_7 = arith.constant dense<0.000000e+00> : vector<8xf32>
    %19 = vector.multi_reduction <add>, %18, %cst_7 [1] : vector<8x16xf32> to vector<8xf32>
    %20 = vector.shape_cast %19 : vector<8xf32> to vector<8x1xf32>
    %21 = arith.subf %10, %8 : vector<8x1xf32>
    %22 = vector.broadcast %21 : vector<8x1xf32> to vector<8x16xf32>
    %23 = arith.subf %6, %22 : vector<8x16xf32>
    %24 = arith.mulf %18, %23 : vector<8x16xf32>
    %cst_8 = arith.constant dense<0.000000e+00> : vector<8xf32>
    %25 = vector.multi_reduction <add>, %24, %cst_8 [1] : vector<8x16xf32> to vector<8xf32>
    %26 = vector.shape_cast %25 : vector<8xf32> to vector<8x1xf32>
    %27 = arith.divf %26, %20 : vector<8x1xf32>
    %28 = math.log %15 : vector<8x1xf32>
    %29 = arith.addf %27, %28 : vector<8x1xf32>
    %30 = math.log %20 : vector<8x1xf32>
    %31 = arith.subf %29, %30 : vector<8x1xf32>
    %32 = vector.shape_cast %31 : vector<8x1xf32> to vector<1x8x1xf32>
    %cst_9 = arith.constant dense<0.000000e+00> : vector<1xf32>
    %33 = vector.multi_reduction <add>, %32, %cst_9 [1, 2] : vector<1x8x1xf32> to vector<1xf32>
    %34 = vector.shape_cast %33 : vector<1xf32> to vector<1x1x1xf32>
    %35 = vector.extract %34[0, 0, 0] : f32 from vector<1x1x1xf32>
    %cst_10 = arith.constant 8.000000e+00 : f32
    %36 = arith.divf %35, %cst_10 : f32
    %cst_11 = arith.constant dense<0xFF800000> : vector<16xf32>
    %37 = vector.multi_reduction <maximumf>, %2, %cst_11 [0] : vector<8x16xf32> to vector<16xf32>
    %38 = vector.shape_cast %37 : vector<16xf32> to vector<1x16xf32>
    %cst_12 = arith.constant dense<0xFF800000> : vector<16xf32>
    %39 = vector.multi_reduction <maximumf>, %5, %cst_12 [0] : vector<8x16xf32> to vector<16xf32>
    %40 = vector.shape_cast %39 : vector<16xf32> to vector<1x16xf32>
    %41 = vector.broadcast %38 : vector<1x16xf32> to vector<8x16xf32>
    %42 = arith.subf %2, %41 : vector<8x16xf32>
    %43 = math.exp %42 : vector<8x16xf32>
    %cst_13 = arith.constant dense<0.000000e+00> : vector<16xf32>
    %44 = vector.multi_reduction <add>, %43, %cst_13 [0] : vector<8x16xf32> to vector<16xf32>
    %45 = vector.shape_cast %44 : vector<16xf32> to vector<1x16xf32>
    %46 = vector.broadcast %40 : vector<1x16xf32> to vector<8x16xf32>
    %47 = arith.subf %5, %46 : vector<8x16xf32>
    %48 = math.exp %47 : vector<8x16xf32>
    %cst_14 = arith.constant dense<0.000000e+00> : vector<16xf32>
    %49 = vector.multi_reduction <add>, %48, %cst_14 [0] : vector<8x16xf32> to vector<16xf32>
    %50 = vector.shape_cast %49 : vector<16xf32> to vector<1x16xf32>
    %51 = arith.subf %40, %38 : vector<1x16xf32>
    %52 = vector.broadcast %51 : vector<1x16xf32> to vector<8x16xf32>
    %53 = arith.subf %6, %52 : vector<8x16xf32>
    %54 = arith.mulf %48, %53 : vector<8x16xf32>
    %cst_15 = arith.constant dense<0.000000e+00> : vector<16xf32>
    %55 = vector.multi_reduction <add>, %54, %cst_15 [0] : vector<8x16xf32> to vector<16xf32>
    %56 = vector.shape_cast %55 : vector<16xf32> to vector<1x16xf32>
    %57 = arith.divf %56, %50 : vector<1x16xf32>
    %58 = math.log %45 : vector<1x16xf32>
    %59 = arith.addf %57, %58 : vector<1x16xf32>
    %60 = math.log %50 : vector<1x16xf32>
    %61 = arith.subf %59, %60 : vector<1x16xf32>
    %62 = vector.shape_cast %61 : vector<1x16xf32> to vector<1x1x16xf32>
    %cst_16 = arith.constant dense<0.000000e+00> : vector<1xf32>
    %63 = vector.multi_reduction <add>, %62, %cst_16 [1, 2] : vector<1x1x16xf32> to vector<1xf32>
    %64 = vector.shape_cast %63 : vector<1xf32> to vector<1x1x1xf32>
    %65 = vector.extract %64[0, 0, 0] : f32 from vector<1x1x1xf32>
    %cst_17 = arith.constant 1.600000e+01 : f32
    %66 = arith.divf %65, %cst_17 : f32
    %67 = arith.addf %36, %66 : f32
    %c0_18 = arith.constant 0 : index
    %c0_19 = arith.constant 0 : index
    %68 = memref.load %arg2[%c0_18, %c0_19] : memref<1x1xf32, #tpu.memory_space<smem>>
    memref.store %67, %arg2[%c0_18, %c0_19] : memref<1x1xf32, #tpu.memory_space<smem>>
    return
  }
}

</mosaic_0001>

<llo_original>
// kernel: tpu_custom_call.1
$region0: #{tpu_custom_call.1}
  #allocation0 [shape = 'u32[]', space=smem, size = 0x4, offset = 0x4, fixed_abs, tag = 'smem constant byte address 0x4 - core index']
  #allocation1 [shape = 'u32[144,128]{1,0:T(1,128)}', space=vmem, size = 0x12000, scoped, tag = 'internal scratch']
  %s0 = inlined_call_operand.hbm [shape: f32[8,16], index: 0, kind: input, shape index: {}]
  %s1 = inlined_call_operand.hbm [shape: f32[8,16], index: 1, kind: input, shape index: {}]
  %s2 = inlined_call_operand.hbm [shape: f32[1,1], index: 2, kind: output, shape index: {}]
  %s3 = sld [smem:[#allocation0]]
  $region26: #{tpu_custom_call.1} parent=0
    _
  %s5 = ssub.s32 1, %s3
  %s6 = scalar_select 0, %s5, %s3
  $region1: #{tpu_custom_call.1} parent=0
    #allocation2 [shape = 'u8[4096]{0}', space=vmem, size = 0x1000, scoped, tag = 'input window, operand 0, single buffered']
    #allocation3 [shape = 's32[1]{0}', space=sflag, size = 0x4, scoped, tag = 'scoped memory for tpu_custom_call.1']
    #allocation4 [shape = 's32[1]{0}', space=sflag, size = 0x4, scoped, tag = 'scoped memory for tpu_custom_call.1']
    #allocation5 [shape = 'u8[4096]{0}', space=vmem, size = 0x1000, scoped, tag = 'input window, operand 1, single buffered']
    #allocation6 [shape = 's32[1]{0}', space=sflag, size = 0x4, scoped, tag = 'scoped memory for tpu_custom_call.1']
    #allocation7 [shape = 'u8[512]{0}', space=smem, size = 0x200, scoped, tag = 'output window, operand 0, single buffered']
    %7 = vsyncpa [#allocation3], 0
    %8 = vsyncpa [#allocation6], 0
    %9 = vsyncpa [#allocation4], 0
    // Predicated region
    $region2: #{tpu_custom_call.1} parent=1 // pred_check
      _
    $region3: #{tpu_custom_call.1} parent=1 // pred_check_branch
      %11 = sbr.rel (0) target = $region5
    $region4: #{tpu_custom_call.1} parent=1 // pred_region
      %s13 = ssub.s32 128, 128
      %14 = vsyncadd [#allocation3], %s13
      %s16 = sshll.u32 [#allocation2], 4
      %s17 = int_to_ptr.vmem [resolvable:$true] %s16
      %19 = dma.hbm_to_vmem [thread:$0]  %s0, 128, %s17, [#allocation3]
    $region5: #{tpu_custom_call.1} parent=1 // pred_fallthru
      _
    // Predicated region
    $region6: #{tpu_custom_call.1} parent=1 // pred_check
      _
    $region7: #{tpu_custom_call.1} parent=1 // pred_check_branch
      %21 = sbr.rel (0) target = $region9
    $region8: #{tpu_custom_call.1} parent=1 // pred_region
      %s23 = ssub.s32 128, 128
      %24 = vsyncadd [#allocation6], %s23
      %s26 = sshll.u32 [#allocation5], 4
      %s27 = int_to_ptr.vmem [resolvable:$true] %s26
      %29 = dma.hbm_to_vmem [thread:$0]  %s1, 128, %s27, [#allocation6]
    $region9: #{tpu_custom_call.1} parent=1 // pred_fallthru
      _
    // Predicated region
    $region10: #{tpu_custom_call.1} parent=1 // pred_check
      _
    $region11: #{tpu_custom_call.1} parent=1 // pred_check_branch
      %31 = sbr.rel (0) target = $region13
    $region12: #{tpu_custom_call.1} parent=1 // pred_region
      %32 = dma.done [#allocation3], 128
    $region13: #{tpu_custom_call.1} parent=1 // pred_fallthru
      _
    // Predicated region
    $region14: #{tpu_custom_call.1} parent=1 // pred_check
      _
    $region15: #{tpu_custom_call.1} parent=1 // pred_check_branch
      %34 = sbr.rel (0) target = $region17
    $region16: #{tpu_custom_call.1} parent=1 // pred_region
      %35 = dma.done [#allocation6], 128
    $region17: #{tpu_custom_call.1} parent=1 // pred_fallthru
      _
    %v36 = vld [vmem:[#allocation2] sm:$0xff]
    %v37 = vmul.f32 %v36, 10.0
    %v38 = vld [vmem:[#allocation5] sm:$0xff]
    %v39 = vmul.f32 %v38, 10.0
    %v40 = vsub.f32 %v39, %v37
    %vm41 = vcmask 130048
    %v42 = vsel %vm41, %v37, -inf
    %43 = vmax.xlane.f32.xlu0 %v42
    %v44 = vpop.xlane.xlu0 %43
    %v45 = vsel %vm41, %v39, -inf
    %46 = vmax.xlane.f32.xlu0 %v45
    %v47 = vpop.xlane.xlu0 %46
    %v48 = vsub.f32 %v37, %v44
    %v49 = vmul.f32 %v48, 1.442695
    %v50 = vpow.pop %v49
    %v51 = vsel %vm41, %v50, 0.0
    %52 = vadd.xlane.f32.xlu0 %v51
    %v53 = vpop.xlane.xlu0 %52
    %v54 = vsub.f32 %v39, %v47
    %v55 = vmul.f32 %v54, 1.442695
    %v56 = vpow.pop %v55
    %v57 = vsel %vm41, %v56, 0.0
    %58 = vadd.xlane.f32.xlu0 %v57
    %v59 = vpop.xlane.xlu0 %58
    %v60 = vsub.f32 %v47, %v44
    %v61 = vsub.f32 %v40, %v60
    %v62 = vmul.f32 %v56, %v61
    %v63 = vsel %vm41, %v62, 0.0
    %64 = vadd.xlane.f32.xlu0 %v63
    %v65 = vpop.xlane.xlu0 %64
    %v66 = vrcp.pop %v59
    %v67 = vmul.f32 %v65, %v66
    %v68 = vlog2.pop %v53
    %v69 = vmul.f32 %v68, 0.6931472
    %v70 = vadd.f32 %v67, %v69
    %v71 = vlog2.pop %v59
    %v72 = vmul.f32 %v71, 0.6931472
    %v73 = vsub.f32 %v70, %v72
    %vm74 = vcmask 7168
    %v75 = vsel %vm74, %v73, 0.0
    %76 = vadd.xlane.f32.xlu0 %v75
    %v77 = vpop.xlane.xlu0 %76
    %v78 = vrot.slane %v77, 4
    %v79 = vadd.f32 %v77, %v78
    %v80 = vrot.slane %v79, 2
    %v81 = vadd.f32 %v79, %v80
    %v82 = vrot.slane %v81, 1
    %v83 = vadd.f32 %v81, %v82
    %s84 = vtos %v83
    %v85 = vrcp.pop 8.0
    %s86 = vtos %v85
    %s87 = smul.f32 %s84, %s86
    %v88 = vrot.slane %v42, 4
    %v89 = vmax.f32 %v42, %v88
    %v90 = vrot.slane %v89, 2
    %v91 = vmax.f32 %v89, %v90
    %v92 = vrot.slane %v91, 1
    %v93 = vmax.f32 %v91, %v92
    %v94 = vrot.slane %v45, 4
    %v95 = vmax.f32 %v45, %v94
    %v96 = vrot.slane %v95, 2
    %v97 = vmax.f32 %v95, %v96
    %v98 = vrot.slane %v97, 1
    %v99 = vmax.f32 %v97, %v98
    %v100 = vsub.f32 %v37, %v93
    %v101 = vmul.f32 %v100, 1.442695
    %v102 = vpow.pop %v101
    %v103 = vsel %vm41, %v102, 0.0
    %v104 = vrot.slane %v103, 4
    %v105 = vadd.f32 %v103, %v104
    %v106 = vrot.slane %v105, 2
    %v107 = vadd.f32 %v105, %v106
    %v108 = vrot.slane %v107, 1
    %v109 = vadd.f32 %v107, %v108
    %v110 = vsub.f32 %v39, %v99
    %v111 = vmul.f32 %v110, 1.442695
    %v112 = vpow.pop %v111
    %v113 = vsel %vm41, %v112, 0.0
    %v114 = vrot.slane %v113, 4
    %v115 = vadd.f32 %v113, %v114
    %v116 = vrot.slane %v115, 2
    %v117 = vadd.f32 %v115, %v116
    %v118 = vrot.slane %v117, 1
    %v119 = vadd.f32 %v117, %v118
    %v120 = vsub.f32 %v99, %v93
    %v121 = vsub.f32 %v40, %v120
    %v122 = vmul.f32 %v112, %v121
    %v123 = vsel %vm41, %v122, 0.0
    %v124 = vrot.slane %v123, 4
    %v125 = vadd.f32 %v123, %v124
    %v126 = vrot.slane %v125, 2
    %v127 = vadd.f32 %v125, %v126
    %v128 = vrot.slane %v127, 1
    %v129 = vadd.f32 %v127, %v128
    %v130 = vrcp.pop %v119
    %v131 = vmul.f32 %v129, %v130
    %v132 = vlog2.pop %v109
    %v133 = vmul.f32 %v132, 0.6931472
    %v134 = vadd.f32 %v131, %v133
    %v135 = vlog2.pop %v119
    %v136 = vmul.f32 %v135, 0.6931472
    %v137 = vsub.f32 %v134, %v136
    %vm138 = vcmask 122880
    %v139 = vsel %vm138, %v137, 0.0
    %140 = vadd.xlane.f32.xlu0 %v139
    %v141 = vpop.xlane.xlu0 %140
    %v142 = vrot.slane %v141, 4
    %v143 = vadd.f32 %v141, %v142
    %v144 = vrot.slane %v143, 2
    %v145 = vadd.f32 %v143, %v144
    %v146 = vrot.slane %v145, 1
    %v147 = vadd.f32 %v145, %v146
    %s148 = vtos %v147
    %v149 = vrcp.pop 16.0
    %s150 = vtos %v149
    %s151 = smul.f32 %s148, %s150
    %s152 = sadd.f32 %s87, %s151
    %s153 = scalar_lea.smem [#allocation7], 0
    %154 = sst [smem:[%s153]] %s152
    // Predicated region
    $region18: #{tpu_custom_call.1} parent=1 // pred_check
      _
    $region19: #{tpu_custom_call.1} parent=1 // pred_check_branch
      %156 = sbr.rel (0) target = $region21
    $region20: #{tpu_custom_call.1} parent=1 // pred_region
      %s158 = ssub.s32 16, 16
      %159 = vsyncadd [#allocation4], %s158
      %162 = dma.smem_to_hbm [#allocation7], 16, %s2, [#allocation4]
    $region21: #{tpu_custom_call.1} parent=1 // pred_fallthru
      _
    // Predicated region
    $region22: #{tpu_custom_call.1} parent=1 // pred_check
      _
    $region23: #{tpu_custom_call.1} parent=1 // pred_check_branch
      %164 = sbr.rel (0) target = $region25
    $region24: #{tpu_custom_call.1} parent=1 // pred_region
      %165 = dma.done [#allocation4], 16
    $region25: #{tpu_custom_call.1} parent=1 // pred_fallthru
      _
    %166 = sfence
    %167 = vsyncpa [#allocation3], 1
    %168 = vsyncpa [#allocation6], 1
    %169 = vsyncpa [#allocation4], 1

</llo_original>
